<compile_context>
chip_gen: v7x
topology: tpu7x:2x2x1
jax: 0.10.0
libtpu: 0.0.40
codegen_flags: <defaults>
</compile_context>

<pallas_src>
import functools

import jax
import jax.numpy as jnp
from jax.experimental import pallas as pl
from jax.experimental.pallas import tpu as pltpu


def _lr_kernel(x_ref, w_ref, b_ref, o_ref, acc_ref, *,
               seq_len, seq_tile, mask_seq):
    """One (batch_tile, seq_tile) grid step.

    x_ref:   (TB, TS, H)  features tile, original dtype
    w_ref:   (1, H) f32   lane-dense weight
    b_ref:   (1,)   f32   bias scalar in SMEM
    o_ref:   (TB, 1)      output tile (resident across the seq axis)
    acc_ref: (TB, H) f32  VMEM accumulator scratch (raw seq-sum, weight deferred)
    """
    si = pl.program_id(1)

    @pl.when(si == 0)
    def _init():
        acc_ref[...] = jnp.zeros_like(acc_ref)

    x = x_ref[...]                                   # (TB, TS, H), input dtype
    if mask_seq:
        # Zero out the padded rows of a partial last seq tile.
        seq_idx = si * seq_tile + jax.lax.broadcasted_iota(
            jnp.int32, (1, seq_tile, 1), 1)
        x = jnp.where(seq_idx < seq_len, x, 0)

    # Per-step work: only the f32 partial sum over the seq tile.
    acc_ref[...] += jnp.sum(x, axis=1, dtype=jnp.float32)   # (TB, H)

    @pl.when(si == pl.num_programs(1) - 1)
    def _finalize():
        # Deferred weight multiply + lane reduce + mean scale + bias, once.
        dot = jnp.sum(acc_ref[...] * w_ref[...], axis=1, keepdims=True)  # (TB,1)
        o_ref[...] = (dot * (1.0 / seq_len) + b_ref[0]).astype(o_ref.dtype)


def _sublane(dtype):
    # Sublane granularity for the second-to-last block dim (dtype packing).
    return max(8, 32 // jnp.dtype(dtype).itemsize)


def _default_tile_budget():
    """Per-generation feature-tile budget (double-buffered by the pipeline)."""
    vmem_bytes = 128 << 20
    try:
        vmem_bytes = int(pltpu.get_tpu_info().vmem_capacity_bytes)
    except Exception:
        pass
    # v5e/v6e (128 MiB VMEM) -> 12 MiB tiles; v7x (64 MiB) -> 8 MiB tiles.
    return max(4 << 20, min(12 << 20, vmem_bytes // 8))


def _pick_tiles(B, S, H, itemsize, budget_bytes, sublane):
    """Pick (TB, TS) so a (TB, TS, H) tile stays around `budget_bytes`."""
    row_bytes = H * itemsize

    # --- batch tile ------------------------------------------------------
    # tb is the second-to-last dim of the (tb, 1) output block, so it must be
    # a multiple of 8 or equal to B.  Cap it at ceil(B/2) so the parallel
    # batch axis has >= 2 tiles (v7x megacore), and so a sublane-deep seq
    # tile still fits the budget.
    if B <= 8:
        tb = B
    else:
        cap_mem = budget_bytes // (sublane * row_bytes)
        half = -(-B // 2)                      # ceil(B/2)
        tb = min(half, max(8, cap_mem))
        tb = max(8, (tb // 8) * 8)
        if tb >= B:
            tb = B

    # --- seq tile ---------------------------------------------------------
    per_row = tb * row_bytes
    if S * per_row <= budget_bytes:
        ts = S                                  # full extent (no constraint)
    else:
        ts = max(sublane, (budget_bytes // (per_row * sublane)) * sublane)
        if ts >= S:
            ts = S
    return tb, ts


def lr_forward(features, weight, bias, *, tile_budget_bytes=None):
    """Pallas implementation of LR.forward.

    features: (B, S, H) or (B, H)
    weight:   any shape with H elements (e.g. nn.Linear weight (1, H) or (H, 1))
    bias:     (1,)
    returns:  (B, 1) in features.dtype
    """
    if features.ndim == 2:
        features = features[:, None, :]          # treat as seq_len == 1
    elif features.ndim != 3:
        raise ValueError("features must be 2-D or 3-D")

    B, S, H = features.shape
    w_lane = jnp.asarray(weight, jnp.float32).reshape(1, H)   # lane-dense, f32
    b_smem = jnp.asarray(bias, jnp.float32).reshape(1)

    itemsize = jnp.dtype(features.dtype).itemsize
    if tile_budget_bytes is None:
        tile_budget_bytes = _default_tile_budget()
    tb, ts = _pick_tiles(B, S, H, itemsize, tile_budget_bytes,
                         _sublane(features.dtype))
    grid = (pl.cdiv(B, tb), pl.cdiv(S, ts))
    mask_seq = (S % ts) != 0

    # VMEM accounting: double-buffered feature tiles + weight + f32 acc + slack.
    feat_tile_bytes = tb * ts * H * itemsize
    vmem_est = (2 * feat_tile_bytes + 2 * H * 4 + tb * H * 4
                + 2 * tb * max(4, itemsize) + (2 << 20))
    vmem_limit = int(min(max(32 << 20, vmem_est), 56 << 20))

    kernel = functools.partial(_lr_kernel, seq_len=S, seq_tile=ts,
                               mask_seq=mask_seq)

    cost = pl.CostEstimate(
        flops=2 * B * S * H,
        transcendentals=0,
        bytes_accessed=B * S * H * itemsize + H * 4 + 4 + B * itemsize,
    )

    out = pl.pallas_call(
        kernel,
        out_shape=jax.ShapeDtypeStruct((B, 1), features.dtype),
        grid_spec=pltpu.PrefetchScalarGridSpec(
            num_scalar_prefetch=0,
            grid=grid,
            in_specs=[
                # (TB, TS, H) feature tile (H full extent, TS sublane-aligned).
                pl.BlockSpec((tb, ts, H), lambda bi, si: (bi, si, 0)),
                # Whole lane-dense f32 weight, constant across the grid.
                pl.BlockSpec((1, H), lambda bi, si: (0, 0)),
                # Bias scalar in SMEM.
                pl.BlockSpec(memory_space=pltpu.MemorySpace.SMEM),
            ],
            # Output block resident across the seq (reduction) axis.
            out_specs=pl.BlockSpec((tb, 1), lambda bi, si: (bi, 0)),
            scratch_shapes=[pltpu.VMEM((tb, H), jnp.float32)],
        ),
        compiler_params=pltpu.CompilerParams(
            dimension_semantics=("parallel", "arbitrary"),
            vmem_limit_bytes=vmem_limit),
        cost_estimate=cost,
    )(features, w_lane, b_smem)
    return out


def lr_reference(features, weight, bias):
    feats = jnp.asarray(features, jnp.float32)
    if feats.ndim == 3:
        feats = jnp.mean(feats, axis=1)
    w = jnp.asarray(weight, jnp.float32).reshape(-1, 1)
    return feats @ w + jnp.asarray(bias, jnp.float32).reshape(1, 1)


if __name__ == "__main__":
    key = jax.random.PRNGKey(0)
    ks = jax.random.split(key, 10)

    # ---- 1) small shape consistent with the module: batch=2, seq=8, hidden=32
    B, S, H = 2, 8, 32
    features = jax.random.normal(ks[0], (B, S, H), dtype=jnp.float32)
    bound = 1.0 / (H ** 0.5)
    weight = jax.random.uniform(ks[1], (H, 1), minval=-bound, maxval=bound,
                                dtype=jnp.float32)
    bias = jax.random.uniform(ks[2], (1,), minval=-bound, maxval=bound,
                              dtype=jnp.float32)

    out = jax.block_until_ready(lr_forward(features, weight, bias))
    ref = lr_reference(features, weight, bias)
    assert out.shape == (B, 1), out.shape
    assert jnp.allclose(out, ref, atol=1e-5, rtol=1e-5), (out, ref)

    # ---- 2) 2-D (already pooled) path -------------------------------------
    out2 = jax.block_until_ready(lr_forward(features[:, 0, :], weight, bias))
    ref2 = lr_reference(features[:, 0, :], weight, bias)
    assert jnp.allclose(out2, ref2, atol=1e-5, rtol=1e-5)

    # ---- 3) larger shape, tiny tile budget -> tiled multi-step pipeline ----
    B2, S2, H2 = 16, 64, 256
    features2 = jax.random.normal(ks[3], (B2, S2, H2), dtype=jnp.float32)
    bound2 = 1.0 / (H2 ** 0.5)
    weight2 = jax.random.uniform(ks[4], (H2, 1), minval=-bound2, maxval=bound2,
                                 dtype=jnp.float32)
    bias2 = jax.random.uniform(ks[5], (1,), minval=-bound2, maxval=bound2,
                               dtype=jnp.float32)
    out3 = jax.block_until_ready(
        lr_forward(features2, weight2, bias2, tile_budget_bytes=64 * 1024))
    ref3 = lr_reference(features2, weight2, bias2)
    assert out3.shape == (B2, 1), out3.shape
    assert jnp.allclose(out3, ref3, atol=1e-4, rtol=1e-4), (out3, ref3)

    # ---- 4) non-divisor B and S -> cdiv grid + in-kernel seq masking -------
    B3, S3, H3 = 12, 20, 256
    features3 = jax.random.normal(ks[6], (B3, S3, H3), dtype=jnp.float32)
    out4 = jax.block_until_ready(
        lr_forward(features3, weight2, bias2, tile_budget_bytes=64 * 1024))
    ref4 = lr_reference(features3, weight2, bias2)
    assert out4.shape == (B3, 1), out4.shape
    assert jnp.allclose(out4, ref4, atol=1e-4, rtol=1e-4), (out4, ref4)

    # ---- 5) bf16 features (f32 accumulation, f32 weight at finalize) -------
    B4, S4, H4 = 8, 16, 128
    features4 = jax.random.normal(ks[7], (B4, S4, H4)).astype(jnp.bfloat16)
    bound4 = 1.0 / (H4 ** 0.5)
    weight4 = jax.random.uniform(ks[8], (H4, 1), minval=-bound4, maxval=bound4,
                                 dtype=jnp.float32)
    bias4 = jax.random.uniform(ks[9], (1,), minval=-bound4, maxval=bound4,
                               dtype=jnp.float32)
    out5 = jax.block_until_ready(lr_forward(features4, weight4, bias4))
    ref5 = lr_reference(features4, weight4, bias4)
    assert out5.dtype == jnp.bfloat16 and out5.shape == (B4, 1)
    assert jnp.allclose(out5.astype(jnp.float32), ref5, atol=5e-2, rtol=5e-2)

    print("KERNEL_OK")
</pallas_src>

<mosaic_0001>
module attributes {stable_mosaic.version = 11 : i64} {
  func.func @_lr_kernel(%arg0: i32, %arg1: i32, %arg2: memref<2x8x32xf32, #tpu.memory_space<vmem>>, %arg3: memref<1x32xf32, #tpu.memory_space<vmem>>, %arg4: memref<1xf32, #tpu.memory_space<smem>>, %arg5: memref<2x1xf32, #tpu.memory_space<vmem>>, %arg6: memref<2x32xf32, #tpu.memory_space<vmem>>) attributes {dimension_semantics = [#tpu.dimension_semantics<parallel>, #tpu.dimension_semantics<arbitrary>], iteration_bounds = array<i64: 1, 1>, scalar_prefetch = 0 : i64, scratch_operands = 1 : i64, tpu.core_type = #tpu.core_type<tc>, window_params = [{transform_indices = @transform_0, window_bounds = array<i64: 2, 8, 32>}, {pipeline_mode = #tpu.pipeline_mode<synchronous>, transform_indices = @transform_1, window_bounds = array<i64: 1, 32>}, {transform_indices = @transform_2, window_bounds = array<i64: 1>}, {transform_indices = @transform_3, window_bounds = array<i64: 2, 1>}]} {
    %c0_i32 = arith.constant 0 : i32
    %0 = arith.cmpi eq, %arg1, %c0_i32 : i32
    %1 = arith.extui %0 : i1 to i32
    %c0_i32_0 = arith.constant 0 : i32
    %2 = arith.cmpi ne, %1, %c0_i32_0 : i32
    scf.if %2 {
      %cst_9 = arith.constant 0.000000e+00 : f32
      %11 = vector.broadcast %cst_9 : f32 to vector<2x32xf32>
      %c0_10 = arith.constant 0 : index
      %c0_11 = arith.constant 0 : index
      %12 = vector.load %arg6[%c0_10, %c0_11] : memref<2x32xf32, #tpu.memory_space<vmem>>, vector<2x32xf32>
      tpu.vector_store %arg6[%c0_10, %c0_11], %11 {strides = array<i32>} : memref<2x32xf32, #tpu.memory_space<vmem>>, vector<2x32xf32>,
    } else {
    }
    %c0 = arith.constant 0 : index
    %c0_1 = arith.constant 0 : index
    %c0_2 = arith.constant 0 : index
    %3 = vector.load %arg2[%c0, %c0_1, %c0_2] : memref<2x8x32xf32, #tpu.memory_space<vmem>>, vector<2x8x32xf32>
    %c0_3 = arith.constant 0 : index
    %c0_4 = arith.constant 0 : index
    %4 = vector.load %arg6[%c0_3, %c0_4] : memref<2x32xf32, #tpu.memory_space<vmem>>, vector<2x32xf32>
    %cst = arith.constant dense<0.000000e+00> : vector<2x32xf32>
    %5 = vector.multi_reduction <add>, %3, %cst [1] : vector<2x8x32xf32> to vector<2x32xf32>
    %6 = arith.addf %4, %5 : vector<2x32xf32>
    %c0_5 = arith.constant 0 : index
    %c0_6 = arith.constant 0 : index
    %7 = vector.load %arg6[%c0_5, %c0_6] : memref<2x32xf32, #tpu.memory_space<vmem>>, vector<2x32xf32>
    tpu.vector_store %arg6[%c0_5, %c0_6], %6 {strides = array<i32>} : memref<2x32xf32, #tpu.memory_space<vmem>>, vector<2x32xf32>,
    %c0_i32_7 = arith.constant 0 : i32
    %8 = arith.cmpi eq, %arg1, %c0_i32_7 : i32
    %9 = arith.extui %8 : i1 to i32
    %c0_i32_8 = arith.constant 0 : i32
    %10 = arith.cmpi ne, %9, %c0_i32_8 : i32
    scf.if %10 {
      %c0_9 = arith.constant 0 : index
      %c0_10 = arith.constant 0 : index
      %11 = vector.load %arg6[%c0_9, %c0_10] : memref<2x32xf32, #tpu.memory_space<vmem>>, vector<2x32xf32>
      %c0_11 = arith.constant 0 : index
      %c0_12 = arith.constant 0 : index
      %12 = vector.load %arg3[%c0_11, %c0_12] : memref<1x32xf32, #tpu.memory_space<vmem>>, vector<1x32xf32>
      %13 = vector.broadcast %12 : vector<1x32xf32> to vector<2x32xf32>
      %14 = arith.mulf %11, %13 : vector<2x32xf32>
      %cst_13 = arith.constant dense<0.000000e+00> : vector<2xf32>
      %15 = vector.multi_reduction <add>, %14, %cst_13 [1] : vector<2x32xf32> to vector<2xf32>
      %16 = vector.shape_cast %15 : vector<2xf32> to vector<2x1xf32>
      %cst_14 = arith.constant 1.250000e-01 : f32
      %17 = vector.broadcast %cst_14 : f32 to vector<2x1xf32>
      %18 = arith.mulf %16, %17 : vector<2x1xf32>
      %c0_15 = arith.constant 0 : index
      %19 = memref.load %arg4[%c0_15] : memref<1xf32, #tpu.memory_space<smem>>
      %20 = vector.broadcast %19 : f32 to vector<2x1xf32>
      %21 = arith.addf %18, %20 : vector<2x1xf32>
      %c0_16 = arith.constant 0 : index
      %c0_17 = arith.constant 0 : index
      %22 = vector.load %arg5[%c0_16, %c0_17] : memref<2x1xf32, #tpu.memory_space<vmem>>, vector<2x1xf32>
      tpu.vector_store %arg5[%c0_16, %c0_17], %21 {strides = array<i32>} : memref<2x1xf32, #tpu.memory_space<vmem>>, vector<2x1xf32>,
    } else {
    }
    return
  }
  func.func @transform_0(%arg0: i32, %arg1: i32) -> (i32, i32, i32) {
    %c0_i32 = arith.constant 0 : i32
    %c0_i32_0 = arith.constant 0 : i32
    return %arg0, %arg1, %c0_i32 : i32, i32, i32
  }
  func.func @transform_1(%arg0: i32, %arg1: i32) -> (i32, i32) {
    %c0_i32 = arith.constant 0 : i32
    %c0_i32_0 = arith.constant 0 : i32
    %c0_i32_1 = arith.constant 0 : i32
    return %c0_i32, %c0_i32_0 : i32, i32
  }
  func.func @transform_2(%arg0: i32, %arg1: i32) -> i32 {
    %c0_i32 = arith.constant 0 : i32
    %c0_i32_0 = arith.constant 0 : i32
    return %c0_i32 : i32
  }
  func.func @transform_3(%arg0: i32, %arg1: i32) -> (i32, i32) {
    %c0_i32 = arith.constant 0 : i32
    %c0_i32_0 = arith.constant 0 : i32
    return %arg0, %c0_i32 : i32, i32
  }
}

</mosaic_0001>

<llo_original>
// kernel: tpu_custom_call.1
$region0: #{tpu_custom_call.1}
  #allocation0 [shape = 'u32[]', space=smem, size = 0x4, offset = 0x4, fixed_abs, tag = 'smem constant byte address 0x4 - core index']
  #allocation1 [shape = 'u32[144,128]{1,0:T(1,128)}', space=vmem, size = 0x12000, scoped, tag = 'internal scratch']
  #allocation2 [shape = 'f32[2,32]{1,0:T(2,128)}', space=vmem, size = 0x400, scoped, tag = 'scratch operand']
  #allocation3 [shape = 'f32[1]{0:T(128)S(6)}', space=smem, size = 0x200, scoped, tag = 'scoped memory for tpu_custom_call.1']
  %s0 = inlined_call_operand.hbm [shape: f32[2,8,32], index: 0, kind: input, shape index: {}]
  %s1 = inlined_call_operand.vmem [shape: f32[1,32], index: 1, kind: input, shape index: {}]
  %s2 = inlined_call_operand.<no memory space> [shape: f32[1], index: 2, kind: input, shape index: {}]
  %s3 = inlined_call_operand.vmem [shape: f32[2,1], index: 3, kind: output, shape index: {}]
  %s4 = sld [smem:[#allocation0]]
  $region34: #{tpu_custom_call.1} parent=0
    _
  %s6 = ssub.s32 1, %s4
  %s7 = scalar_select 0, %s6, %s4
  %8 = sst [smem:[#allocation3]] %s2
  $region1: #{tpu_custom_call.1} parent=0
    #allocation4 [shape = 'u8[8192]{0}', space=vmem, size = 0x2000, scoped, tag = 'input window, operand 0, single buffered']
    #allocation5 [shape = 's32[1]{0}', space=sflag, size = 0x4, scoped, tag = 'scoped memory for tpu_custom_call.1']
    %9 = vsyncpa [#allocation5], 0
    // Predicated region
    $region2: #{tpu_custom_call.1} parent=1 // pred_check
      _
    $region3: #{tpu_custom_call.1} parent=1 // pred_check_branch
      %11 = sbr.rel (0) target = $region5
    $region4: #{tpu_custom_call.1} parent=1 // pred_region
      %s13 = ssub.s32 256, 256
      %14 = vsyncadd [#allocation5], %s13
      %s15 = sshll.u32 [#allocation4], 4
      %s16 = int_to_ptr.vmem [resolvable:$true] %s15
      %21 = dma.hbm_to_vmem [thread:$0]  %s0, 256, %s16, [#allocation5], 128, 128, 8
    $region5: #{tpu_custom_call.1} parent=1 // pred_fallthru
      _
    // Predicated region
    $region6: #{tpu_custom_call.1} parent=1 // pred_check
      _
    $region7: #{tpu_custom_call.1} parent=1 // pred_check_branch
      %23 = sbr.rel (0) target = $region9
    $region8: #{tpu_custom_call.1} parent=1 // pred_region
      _
    $region9: #{tpu_custom_call.1} parent=1 // pred_fallthru
      _
    // Predicated region
    $region10: #{tpu_custom_call.1} parent=1 // pred_check
      _
    $region11: #{tpu_custom_call.1} parent=1 // pred_check_branch
      %25 = sbr.rel (0) target = $region13
    $region12: #{tpu_custom_call.1} parent=1 // pred_region
      _
    $region13: #{tpu_custom_call.1} parent=1 // pred_fallthru
      _
    // Predicated region
    $region14: #{tpu_custom_call.1} parent=1 // pred_check
      _
    $region15: #{tpu_custom_call.1} parent=1 // pred_check_branch
      %27 = sbr.rel (0) target = $region17
    $region16: #{tpu_custom_call.1} parent=1 // pred_region
      %28 = dma.done [#allocation5], 256
    $region17: #{tpu_custom_call.1} parent=1 // pred_fallthru
      _
    %p29 = scmp.eq.s32.totalorder 0, 0
    // Predicated region
    $region18: #{tpu_custom_call.1} parent=1 // pred_check
      %p30 = pneg %p29
    $region19: #{tpu_custom_call.1} parent=1 // pred_check_branch
      %32 = sbr.rel (%p30) target = $region21
    $region20: #{tpu_custom_call.1} parent=1 // pred_region
      %vm33 = vcmask 254976
      %34 = vst.msk [vmem:[#allocation2] sm:$0x3] %vm33, 0.0
    $region21: #{tpu_custom_call.1} parent=1 // pred_fallthru
      _
    %v35 = vld [vmem:[#allocation4] sm:$0xff]
    %v36 = vld [vmem:[#allocation4 + $0x8] sm:$0xff]
    %v37 = vld [vmem:[#allocation2] sm:$0x3]
    %vm38 = vcmask 261120
    %v39 = vsel %vm38, %v35, 0.0
    %v40 = vrot.slane %v39, 4
    %v41 = vadd.f32 %v39, %v40
    %v42 = vrot.slane %v41, 2
    %v43 = vadd.f32 %v41, %v42
    %v44 = vrot.slane %v43, 1
    %v45 = vadd.f32 %v43, %v44
    %v46 = vsel %vm38, %v36, 0.0
    %v47 = vrot.slane %v46, 4
    %v48 = vadd.f32 %v46, %v47
    %v49 = vrot.slane %v48, 2
    %v50 = vadd.f32 %v48, %v49
    %v51 = vrot.slane %v50, 1
    %v52 = vadd.f32 %v50, %v51
    %vm55 = vcmask 1041409
    %v56 = vsel %vm55, %v52, %v45
    %v58 = vadd.f32 %v37, %v56
    %vm59 = vcmask 254976
    %60 = vst.msk [vmem:[#allocation2] sm:$0x3] %vm59, %v58
    // Predicated region
    $region22: #{tpu_custom_call.1} parent=1 // pred_check
      %p61 = pneg %p29
    $region23: #{tpu_custom_call.1} parent=1 // pred_check_branch
      %63 = sbr.rel (%p61) target = $region25
    $region24: #{tpu_custom_call.1} parent=1 // pred_region
      %v64 = vld [vmem:[#allocation2] sm:$0x3]
      %v65 = vld [vmem:[%s1] sm:$0x1]
      %v67 = vlaneseq
      %v68 = vshrl.u32 %v67, 7
      %v69 = vsub.s32 0, %v68
      %v70 = vrot.slane %v65, %v69
      %v72 = vmul.f32 %v64, %v70
      %v73 = vsel %vm59, %v72, 0.0
      %74 = vadd.xlane.f32.xlu0 %v73
      %v75 = vpop.xlane.xlu0 %74
      %v76 = vmul.f32 %v75, 0.125
      %s77 = sld [smem:[#allocation3]]
      %v78 = vstv %s77
      %v79 = vadd.f32 %v76, %v78
      %vm80 = vcmask 1024
      %81 = vst.msk [vmem:[%s3] sm:$0x3] %vm80, %v79
    $region25: #{tpu_custom_call.1} parent=1 // pred_fallthru
      _
    // Predicated region
    $region26: #{tpu_custom_call.1} parent=1 // pred_check
      _
    $region27: #{tpu_custom_call.1} parent=1 // pred_check_branch
      %83 = sbr.rel (0) target = $region29
    $region28: #{tpu_custom_call.1} parent=1 // pred_region
      _
    $region29: #{tpu_custom_call.1} parent=1 // pred_fallthru
      _
    // Predicated region
    $region30: #{tpu_custom_call.1} parent=1 // pred_check
      _
    $region31: #{tpu_custom_call.1} parent=1 // pred_check_branch
      %85 = sbr.rel (0) target = $region33
    $region32: #{tpu_custom_call.1} parent=1 // pred_region
      _
    $region33: #{tpu_custom_call.1} parent=1 // pred_fallthru
      _
    %86 = vsyncpa [#allocation5], 1

</llo_original>
